<compile_context>
chip_gen: v5e
topology: v5e:2x2
jax: 0.10.0
libtpu: 0.0.40
codegen_flags: <defaults>
</compile_context>

<pallas_src>
import jax
import jax.numpy as jnp
from jax.experimental import pallas as pl
from jax.experimental.pallas import tpu as pltpu

STATE_DIM = 4       # CartPole-v1 observation dim
ACTION_DIM = 2      # CartPole-v1 action dim (sigmoid-softmax identity needs ==2)
HIDDEN = 32
_LANE = 128         # f32 lane width
_MAX_B_TILE = 32768  # lanes per grid step (~10 MiB VMEM incl. double buffers)
_SPLIT_LANES = 16384  # above this, force >=2 tiles so both v7x TCs get work
_VMEM_LIMIT = 32 << 20  # raise v5e's 16 MiB scoped default; safe on v6e/v7x


def _round_up(n, m):
    return ((n + m - 1) // m) * m


def _cdiv(a, b):
    return (a + b - 1) // b


def _choose_tiling(batch, max_b_tile):
    """Pick (b_tile, b_pad, n_tiles): lane-aligned, minimal padding, >=2 tiles
    for large batches (v7x megacore)."""
    b_pad128 = _round_up(max(batch, 1), _LANE)
    cap = max(_LANE, (min(max_b_tile, b_pad128) // _LANE) * _LANE)
    n_tiles = _cdiv(b_pad128, cap)
    if b_pad128 >= _SPLIT_LANES:
        n_tiles = max(n_tiles, 2)
    b_tile = _round_up(_cdiv(b_pad128, n_tiles), _LANE)
    b_pad = n_tiles * b_tile
    return b_tile, b_pad, n_tiles


def actor_kernel(xT_ref, w1_ref, b1_ref, dw_ref, db_ref, out_ref):
    # xT : [STATE_DIM, Bt]      w1 : [HIDDEN, STATE_DIM]   b1 : [HIDDEN, 1]
    # dw : [1, HIDDEN]          db : [1, 1]                out: [ACTION_DIM, Bt]
    xT = xT_ref[...]
    w1 = w1_ref[...]
    bt = xT.shape[-1]

    # ---- layer 1: h = relu(w1 @ x + b1), K=4 unrolled VPU outer-product FMAs ----
    h = jnp.broadcast_to(b1_ref[...], (HIDDEN, bt))          # hoisted broadcast
    for k in range(STATE_DIM):                               # static unroll, K == 4
        h = h + w1[:, k:k + 1] * xT[k:k + 1, :]              # [HIDDEN,1] * [1,Bt]
    h = jnp.maximum(h, 0.0)

    # ---- layer 2 + 2-way softmax via the sigmoid identity ----
    # softmax([l0, l1])[1] == sigmoid(l1 - l0); only the logit difference matters.
    d = jnp.dot(dw_ref[...], h, preferred_element_type=jnp.float32) + db_ref[...]  # [1, Bt]
    out_ref[1:2, :] = jax.nn.sigmoid(d)                      # p1, EUP
    out_ref[0:1, :] = jax.nn.sigmoid(-d)                     # p0 (stable, no 1-p1)


def actor_forward(x, w1, b1, w2, b2, *, max_b_tile=_MAX_B_TILE):
    """Actor forward pass.

    x  : [B, STATE_DIM] float32 (PyTorch input layout)
    w1 : [HIDDEN, STATE_DIM],  b1 : [HIDDEN]      (PyTorch nn.Linear weight layout)
    w2 : [ACTION_DIM, HIDDEN], b2 : [ACTION_DIM]
    returns action probabilities [B, ACTION_DIM].
    """
    assert ACTION_DIM == 2, "sigmoid-softmax identity requires exactly 2 actions"
    B = x.shape[0]
    b_tile, b_pad, n_tiles = _choose_tiling(B, max_b_tile)

    # batch-on-lanes: zero-pad the batch to the tiled extent, then transpose.
    # (Zero padding keeps the padded lanes finite; they are sliced off below.)
    xT = jnp.pad(x.astype(jnp.float32), ((0, b_pad - B), (0, 0))).T   # [STATE_DIM, b_pad]

    b1c = b1.reshape(HIDDEN, 1).astype(jnp.float32)
    # Precompute the layer-2 logit-difference row once on the host side.
    dw = (w2[1] - w2[0]).reshape(1, HIDDEN).astype(jnp.float32)
    db = (b2[1] - b2[0]).reshape(1, 1).astype(jnp.float32)

    outT = pl.pallas_call(
        actor_kernel,
        out_shape=jax.ShapeDtypeStruct((ACTION_DIM, b_pad), jnp.float32),
        grid_spec=pltpu.PrefetchScalarGridSpec(
            num_scalar_prefetch=0,
            grid=(n_tiles,),
            in_specs=[
                # activations stream per batch tile (double-buffered)
                pl.BlockSpec((STATE_DIM, b_tile), lambda i: (0, i)),
                # weights / biases stay VMEM-resident (constant block index)
                pl.BlockSpec((HIDDEN, STATE_DIM), lambda i: (0, 0)),
                pl.BlockSpec((HIDDEN, 1), lambda i: (0, 0)),
                pl.BlockSpec((1, HIDDEN), lambda i: (0, 0)),
                pl.BlockSpec((1, 1), lambda i: (0, 0)),
            ],
            out_specs=pl.BlockSpec((ACTION_DIM, b_tile), lambda i: (0, i)),
        ),
        compiler_params=pltpu.CompilerParams(
            dimension_semantics=("parallel",),     # lets v7x split batch across 2 TCs
            vmem_limit_bytes=_VMEM_LIMIT,          # big tiles on v5e's 16 MiB default
        ),
    )(xT, w1.astype(jnp.float32), b1c, dw, db)

    # transpose back to the PyTorch convention and drop lane padding.
    return outT.T[:B, :]


def init_params(key):
    # PyTorch nn.Linear default init: U(-1/sqrt(fan_in), 1/sqrt(fan_in)),
    # weights stored in PyTorch [out_features, in_features] layout.
    k1, k2, k3, k4 = jax.random.split(key, 4)
    bound1 = 1.0 / jnp.sqrt(jnp.float32(STATE_DIM))
    bound2 = 1.0 / jnp.sqrt(jnp.float32(HIDDEN))
    w1 = jax.random.uniform(k1, (HIDDEN, STATE_DIM), jnp.float32, -bound1, bound1)
    b1 = jax.random.uniform(k2, (HIDDEN,), jnp.float32, -bound1, bound1)
    w2 = jax.random.uniform(k3, (ACTION_DIM, HIDDEN), jnp.float32, -bound2, bound2)
    b2 = jax.random.uniform(k4, (ACTION_DIM,), jnp.float32, -bound2, bound2)
    return w1, b1, w2, b2


def reference_forward(x, w1, b1, w2, b2):
    h = jnp.maximum(x @ w1.T + b1, 0.0)
    logits = h @ w2.T + b2
    return jax.nn.softmax(logits, axis=-1)


if __name__ == "__main__":
    key = jax.random.PRNGKey(0)
    pkey, xkey = jax.random.split(key)
    w1, b1, w2, b2 = init_params(pkey)

    B = 8  # small batch of CartPole states
    x = jax.random.normal(xkey, (B, STATE_DIM), jnp.float32)

    # jit the wrapper so the boundary pad/transpose/slice fuse with neighbors.
    actor_fn = jax.jit(actor_forward)
    out = jax.block_until_ready(actor_fn(x, w1, b1, w2, b2))

    ref = reference_forward(x, w1, b1, w2, b2)
    assert out.shape == (B, ACTION_DIM)
    assert jnp.allclose(out, ref, atol=1e-5, rtol=1e-5)
    # probabilities sum to 1 along the action dim (padded lanes already sliced off)
    assert jnp.allclose(jnp.sum(out, axis=-1), jnp.ones((B,)), atol=1e-5)

    print("KERNEL_OK")
</pallas_src>

<mosaic_0001>
module attributes {stable_mosaic.version = 11 : i64} {
  func.func @actor_kernel(%arg0: i32, %arg1: memref<4x128xf32, #tpu.memory_space<vmem>>, %arg2: memref<32x4xf32, #tpu.memory_space<vmem>>, %arg3: memref<32x1xf32, #tpu.memory_space<vmem>>, %arg4: memref<1x32xf32, #tpu.memory_space<vmem>>, %arg5: memref<1x1xf32, #tpu.memory_space<vmem>>, %arg6: memref<2x128xf32, #tpu.memory_space<vmem>>) attributes {dimension_semantics = [#tpu.dimension_semantics<parallel>], iteration_bounds = array<i64: 1>, scalar_prefetch = 0 : i64, scratch_operands = 0 : i64, tpu.core_type = #tpu.core_type<tc>, window_params = [{transform_indices = @transform_0, window_bounds = array<i64: 4, 128>}, {pipeline_mode = #tpu.pipeline_mode<synchronous>, transform_indices = @transform_1, window_bounds = array<i64: 32, 4>}, {pipeline_mode = #tpu.pipeline_mode<synchronous>, transform_indices = @transform_2, window_bounds = array<i64: 32, 1>}, {pipeline_mode = #tpu.pipeline_mode<synchronous>, transform_indices = @transform_3, window_bounds = array<i64: 1, 32>}, {pipeline_mode = #tpu.pipeline_mode<synchronous>, transform_indices = @transform_4, window_bounds = array<i64: 1, 1>}, {transform_indices = @transform_5, window_bounds = array<i64: 2, 128>}]} {
    %c0 = arith.constant 0 : index
    %c0_0 = arith.constant 0 : index
    %0 = vector.load %arg1[%c0, %c0_0] : memref<4x128xf32, #tpu.memory_space<vmem>>, vector<4x128xf32>
    %c0_1 = arith.constant 0 : index
    %c0_2 = arith.constant 0 : index
    %1 = vector.load %arg2[%c0_1, %c0_2] : memref<32x4xf32, #tpu.memory_space<vmem>>, vector<32x4xf32>
    %c0_3 = arith.constant 0 : index
    %c0_4 = arith.constant 0 : index
    %2 = vector.load %arg3[%c0_3, %c0_4] : memref<32x1xf32, #tpu.memory_space<vmem>>, vector<32x1xf32>
    %3 = vector.shape_cast %2 : vector<32x1xf32> to vector<32x1xf32>
    %4 = vector.broadcast %3 : vector<32x1xf32> to vector<32x128xf32>
    %5 = vector.extract_strided_slice %1 {offsets = [0, 0], sizes = [32, 1], strides = [1, 1]} : vector<32x4xf32> to vector<32x1xf32>
    %6 = vector.extract_strided_slice %0 {offsets = [0, 0], sizes = [1, 128], strides = [1, 1]} : vector<4x128xf32> to vector<1x128xf32>
    %7 = vector.broadcast %5 : vector<32x1xf32> to vector<32x128xf32>
    %8 = vector.broadcast %6 : vector<1x128xf32> to vector<32x128xf32>
    %9 = arith.mulf %7, %8 : vector<32x128xf32>
    %10 = arith.addf %4, %9 : vector<32x128xf32>
    %11 = vector.extract_strided_slice %1 {offsets = [0, 1], sizes = [32, 1], strides = [1, 1]} : vector<32x4xf32> to vector<32x1xf32>
    %12 = vector.extract_strided_slice %0 {offsets = [1, 0], sizes = [1, 128], strides = [1, 1]} : vector<4x128xf32> to vector<1x128xf32>
    %13 = vector.broadcast %11 : vector<32x1xf32> to vector<32x128xf32>
    %14 = vector.broadcast %12 : vector<1x128xf32> to vector<32x128xf32>
    %15 = arith.mulf %13, %14 : vector<32x128xf32>
    %16 = arith.addf %10, %15 : vector<32x128xf32>
    %17 = vector.extract_strided_slice %1 {offsets = [0, 2], sizes = [32, 1], strides = [1, 1]} : vector<32x4xf32> to vector<32x1xf32>
    %18 = vector.extract_strided_slice %0 {offsets = [2, 0], sizes = [1, 128], strides = [1, 1]} : vector<4x128xf32> to vector<1x128xf32>
    %19 = vector.broadcast %17 : vector<32x1xf32> to vector<32x128xf32>
    %20 = vector.broadcast %18 : vector<1x128xf32> to vector<32x128xf32>
    %21 = arith.mulf %19, %20 : vector<32x128xf32>
    %22 = arith.addf %16, %21 : vector<32x128xf32>
    %23 = vector.extract_strided_slice %1 {offsets = [0, 3], sizes = [32, 1], strides = [1, 1]} : vector<32x4xf32> to vector<32x1xf32>
    %24 = vector.extract_strided_slice %0 {offsets = [3, 0], sizes = [1, 128], strides = [1, 1]} : vector<4x128xf32> to vector<1x128xf32>
    %25 = vector.broadcast %23 : vector<32x1xf32> to vector<32x128xf32>
    %26 = vector.broadcast %24 : vector<1x128xf32> to vector<32x128xf32>
    %27 = arith.mulf %25, %26 : vector<32x128xf32>
    %28 = arith.addf %22, %27 : vector<32x128xf32>
    %cst = arith.constant 0.000000e+00 : f32
    %29 = vector.broadcast %cst : f32 to vector<32x128xf32>
    %30 = arith.maximumf %28, %29 : vector<32x128xf32>
    %c0_5 = arith.constant 0 : index
    %c0_6 = arith.constant 0 : index
    %31 = vector.load %arg4[%c0_5, %c0_6] : memref<1x32xf32, #tpu.memory_space<vmem>>, vector<1x32xf32>
    %cst_7 = arith.constant dense<0.000000e+00> : vector<1x128xf32>
    %32 = tpu.matmul %31, %30, %cst_7 {dimension_numbers = #tpu.dot_dimension_numbers<[1], [0], [0], [1], [0, 0, 1, 1], [], []>} : vector<1x32xf32>, vector<32x128xf32>, vector<1x128xf32> -> vector<1x128xf32>
    %c0_8 = arith.constant 0 : index
    %c0_9 = arith.constant 0 : index
    %33 = vector.load %arg5[%c0_8, %c0_9] : memref<1x1xf32, #tpu.memory_space<vmem>>, vector<1x1xf32>
    %34 = vector.broadcast %33 : vector<1x1xf32> to vector<1x128xf32>
    %35 = arith.addf %32, %34 : vector<1x128xf32>
    %36 = arith.negf %35 : vector<1x128xf32>
    %37 = math.exp %36 : vector<1x128xf32>
    %cst_10 = arith.constant 1.000000e+00 : f32
    %38 = vector.broadcast %cst_10 : f32 to vector<1x128xf32>
    %39 = arith.addf %38, %37 : vector<1x128xf32>
    %40 = arith.divf %38, %39 : vector<1x128xf32>
    %c1 = arith.constant 1 : index
    %c0_11 = arith.constant 0 : index
    %41 = vector.load %arg6[%c1, %c0_11] : memref<2x128xf32, #tpu.memory_space<vmem>>, vector<1x128xf32>
    tpu.vector_store %arg6[%c1, %c0_11], %40 {strides = array<i32>} : memref<2x128xf32, #tpu.memory_space<vmem>>, vector<1x128xf32>,
    %cst_12 = arith.constant 0.000000e+00 : f32
    %42 = vector.broadcast %cst_12 : f32 to vector<1x128xf32>
    %43 = arith.subf %42, %35 : vector<1x128xf32>
    %44 = arith.negf %43 : vector<1x128xf32>
    %45 = math.exp %44 : vector<1x128xf32>
    %cst_13 = arith.constant 1.000000e+00 : f32
    %46 = vector.broadcast %cst_13 : f32 to vector<1x128xf32>
    %47 = arith.addf %46, %45 : vector<1x128xf32>
    %48 = arith.divf %46, %47 : vector<1x128xf32>
    %c0_14 = arith.constant 0 : index
    %c0_15 = arith.constant 0 : index
    %49 = vector.load %arg6[%c0_14, %c0_15] : memref<2x128xf32, #tpu.memory_space<vmem>>, vector<1x128xf32>
    tpu.vector_store %arg6[%c0_14, %c0_15], %48 {strides = array<i32>} : memref<2x128xf32, #tpu.memory_space<vmem>>, vector<1x128xf32>,
    return
  }
  func.func @transform_0(%arg0: i32) -> (i32, i32) {
    %c0_i32 = arith.constant 0 : i32
    %c0_i32_0 = arith.constant 0 : i32
    return %c0_i32, %arg0 : i32, i32
  }
  func.func @transform_1(%arg0: i32) -> (i32, i32) {
    %c0_i32 = arith.constant 0 : i32
    %c0_i32_0 = arith.constant 0 : i32
    %c0_i32_1 = arith.constant 0 : i32
    return %c0_i32, %c0_i32_0 : i32, i32
  }
  func.func @transform_2(%arg0: i32) -> (i32, i32) {
    %c0_i32 = arith.constant 0 : i32
    %c0_i32_0 = arith.constant 0 : i32
    %c0_i32_1 = arith.constant 0 : i32
    return %c0_i32, %c0_i32_0 : i32, i32
  }
  func.func @transform_3(%arg0: i32) -> (i32, i32) {
    %c0_i32 = arith.constant 0 : i32
    %c0_i32_0 = arith.constant 0 : i32
    %c0_i32_1 = arith.constant 0 : i32
    return %c0_i32, %c0_i32_0 : i32, i32
  }
  func.func @transform_4(%arg0: i32) -> (i32, i32) {
    %c0_i32 = arith.constant 0 : i32
    %c0_i32_0 = arith.constant 0 : i32
    %c0_i32_1 = arith.constant 0 : i32
    return %c0_i32, %c0_i32_0 : i32, i32
  }
  func.func @transform_5(%arg0: i32) -> (i32, i32) {
    %c0_i32 = arith.constant 0 : i32
    %c0_i32_0 = arith.constant 0 : i32
    return %c0_i32, %arg0 : i32, i32
  }
}

</mosaic_0001>

<llo_original>
// kernel: actor_forward.1
$region0: #{actor_forward.1}
  #allocation0 [shape = 'u32[]', space=smem, size = 0x4, offset = 0x4, fixed_abs, tag = 'smem constant byte address 0x4 - core index']
  #allocation1 [shape = 'u32[72,128]{1,0:T(1,128)}', space=vmem, size = 0x9000, scoped, tag = 'internal scratch']
  #allocation2 [shape = 'f32[1,1]{1,0:T(1,128)S(1)}', space=vmem, size = 0x200, scoped, tag = 'scoped memory for actor_forward.1']
  %s0 = inlined_call_operand.vmem [shape: f32[4,128], index: 0, kind: input, shape index: {}]
  %s1 = inlined_call_operand.vmem [shape: f32[32,4], index: 1, kind: input, shape index: {}]
  %s2 = inlined_call_operand.vmem [shape: f32[32,1], index: 2, kind: input, shape index: {}]
  %s3 = inlined_call_operand.vmem [shape: f32[1,32], index: 3, kind: input, shape index: {}]
  %s4 = inlined_call_operand.<no memory space> [shape: f32[1,1], index: 4, kind: input, shape index: {}]
  %s5 = inlined_call_operand.hbm [shape: f32[2,128], index: 5, kind: output, shape index: {}]
  %s6 = sld [smem:[#allocation0]]
  $region30: #{actor_forward.1} parent=0
    _
  %s8 = ssub.s32 1, %s6
  %s9 = scalar_select 0, %s8, %s6
  %v10 = vstv %s4
  %11 = vst [vmem:[#allocation2] sm:$0x1] %v10
  $region1: #{actor_forward.1} parent=0
    #allocation3 [shape = 'u8[1024]{0}', space=vmem, size = 0x400, scoped, tag = 'output window, operand 0, single buffered']
    #allocation4 [shape = 's32[1]{0}', space=sflag, size = 0x4, scoped, tag = 'scoped memory for actor_forward.1']
    %12 = vsyncpa [#allocation4], 0
    // Predicated region
    $region2: #{actor_forward.1} parent=1 // pred_check
      _
    $region3: #{actor_forward.1} parent=1 // pred_check_branch
      %14 = sbr.rel (0) target = $region5
    $region4: #{actor_forward.1} parent=1 // pred_region
      _
    $region5: #{actor_forward.1} parent=1 // pred_fallthru
      _
    // Predicated region
    $region6: #{actor_forward.1} parent=1 // pred_check
      _
    $region7: #{actor_forward.1} parent=1 // pred_check_branch
      %16 = sbr.rel (0) target = $region9
    $region8: #{actor_forward.1} parent=1 // pred_region
      _
    $region9: #{actor_forward.1} parent=1 // pred_fallthru
      _
    // Predicated region
    $region10: #{actor_forward.1} parent=1 // pred_check
      _
    $region11: #{actor_forward.1} parent=1 // pred_check_branch
      %18 = sbr.rel (0) target = $region13
    $region12: #{actor_forward.1} parent=1 // pred_region
      _
    $region13: #{actor_forward.1} parent=1 // pred_fallthru
      _
    // Predicated region
    $region14: #{actor_forward.1} parent=1 // pred_check
      _
    $region15: #{actor_forward.1} parent=1 // pred_check_branch
      %20 = sbr.rel (0) target = $region17
    $region16: #{actor_forward.1} parent=1 // pred_region
      _
    $region17: #{actor_forward.1} parent=1 // pred_fallthru
      _
    // Predicated region
    $region18: #{actor_forward.1} parent=1 // pred_check
      _
    $region19: #{actor_forward.1} parent=1 // pred_check_branch
      %22 = sbr.rel (0) target = $region21
    $region20: #{actor_forward.1} parent=1 // pred_region
      _
    $region21: #{actor_forward.1} parent=1 // pred_fallthru
      _
    %v23 = vld [vmem:[%s0] sm:$0xf]
    %v24 = vld [vmem:[%s1] sm:$0xff]
    %v25 = vld [vmem:[%s1 + $0x8] sm:$0xff]
    %v26 = vld [vmem:[%s1 + $0x10] sm:$0xff]
    %v27 = vld [vmem:[%s1 + $0x18] sm:$0xff]
    %v28 = vld [vmem:[%s2] sm:$0xff]
    %v29 = vld [vmem:[%s2 + $0x8] sm:$0xff]
    %v30 = vld [vmem:[%s2 + $0x10] sm:$0xff]
    %v31 = vld [vmem:[%s2 + $0x18] sm:$0xff]
    %33 = vset.pattern.permute.xlu0 0
    %34 = vperm.xlu0 %33, %v28
    %v35 = vpop.permute.xlu0 %34
    %38 = vset.pattern.permute.xlu0 0
    %39 = vperm.xlu0 %38, %v29
    %v40 = vpop.permute.xlu0 %39
    %43 = vset.pattern.permute.xlu0 0
    %44 = vperm.xlu0 %43, %v30
    %v45 = vpop.permute.xlu0 %44
    %48 = vset.pattern.permute.xlu0 0
    %49 = vperm.xlu0 %48, %v31
    %v50 = vpop.permute.xlu0 %49
    %53 = vset.pattern.permute.xlu0 0
    %54 = vperm.xlu0 %53, %v24
    %v55 = vpop.permute.xlu0 %54
    %58 = vset.pattern.permute.xlu0 0
    %59 = vperm.xlu0 %58, %v25
    %v60 = vpop.permute.xlu0 %59
    %63 = vset.pattern.permute.xlu0 0
    %64 = vperm.xlu0 %63, %v26
    %v65 = vpop.permute.xlu0 %64
    %68 = vset.pattern.permute.xlu0 0
    %69 = vperm.xlu0 %68, %v27
    %v70 = vpop.permute.xlu0 %69
    %v72 = vperm.slane %v23, 0
    %v73 = vmul.f32 %v55, %v72
    %v74 = vmul.f32 %v60, %v72
    %v75 = vmul.f32 %v65, %v72
    %v76 = vmul.f32 %v70, %v72
    %v77 = vadd.f32 %v35, %v73
    %v78 = vadd.f32 %v40, %v74
    %v79 = vadd.f32 %v45, %v75
    %v80 = vadd.f32 %v50, %v76
    %81 = vset.pattern.permute.xlu0 1
    %82 = vperm.xlu0 %81, %v24
    %v83 = vpop.permute.xlu0 %82
    %85 = vset.pattern.permute.xlu0 1
    %86 = vperm.xlu0 %85, %v25
    %v87 = vpop.permute.xlu0 %86
    %89 = vset.pattern.permute.xlu0 1
    %90 = vperm.xlu0 %89, %v26
    %v91 = vpop.permute.xlu0 %90
    %93 = vset.pattern.permute.xlu0 1
    %94 = vperm.xlu0 %93, %v27
    %v95 = vpop.permute.xlu0 %94
    %v97 = vperm.slane %v23, 1
    %v98 = vmul.f32 %v83, %v97
    %v99 = vmul.f32 %v87, %v97
    %v100 = vmul.f32 %v91, %v97
    %v101 = vmul.f32 %v95, %v97
    %v102 = vadd.f32 %v77, %v98
    %v103 = vadd.f32 %v78, %v99
    %v104 = vadd.f32 %v79, %v100
    %v105 = vadd.f32 %v80, %v101
    %106 = vset.pattern.permute.xlu0 2
    %107 = vperm.xlu0 %106, %v24
    %v108 = vpop.permute.xlu0 %107
    %110 = vset.pattern.permute.xlu0 2
    %111 = vperm.xlu0 %110, %v25
    %v112 = vpop.permute.xlu0 %111
    %114 = vset.pattern.permute.xlu0 2
    %115 = vperm.xlu0 %114, %v26
    %v116 = vpop.permute.xlu0 %115
    %118 = vset.pattern.permute.xlu0 2
    %119 = vperm.xlu0 %118, %v27
    %v120 = vpop.permute.xlu0 %119
    %v122 = vperm.slane %v23, 2
    %v123 = vmul.f32 %v108, %v122
    %v124 = vmul.f32 %v112, %v122
    %v125 = vmul.f32 %v116, %v122
    %v126 = vmul.f32 %v120, %v122
    %v127 = vadd.f32 %v102, %v123
    %v128 = vadd.f32 %v103, %v124
    %v129 = vadd.f32 %v104, %v125
    %v130 = vadd.f32 %v105, %v126
    %131 = vset.pattern.permute.xlu0 3
    %132 = vperm.xlu0 %131, %v24
    %v133 = vpop.permute.xlu0 %132
    %135 = vset.pattern.permute.xlu0 3
    %136 = vperm.xlu0 %135, %v25
    %v137 = vpop.permute.xlu0 %136
    %139 = vset.pattern.permute.xlu0 3
    %140 = vperm.xlu0 %139, %v26
    %v141 = vpop.permute.xlu0 %140
    %143 = vset.pattern.permute.xlu0 3
    %144 = vperm.xlu0 %143, %v27
    %v145 = vpop.permute.xlu0 %144
    %v147 = vperm.slane %v23, 3
    %v148 = vmul.f32 %v133, %v147
    %v149 = vmul.f32 %v137, %v147
    %v150 = vmul.f32 %v141, %v147
    %v151 = vmul.f32 %v145, %v147
    %v152 = vadd.f32 %v127, %v148
    %v153 = vadd.f32 %v128, %v149
    %v154 = vadd.f32 %v129, %v150
    %v155 = vadd.f32 %v130, %v151
    %v156 = vmax.f32 %v152, 0.0
    %v157 = vmax.f32 %v153, 0.0
    %v158 = vmax.f32 %v154, 0.0
    %v159 = vmax.f32 %v155, 0.0
    %v160 = vld [vmem:[%s3] sm:$0x1]
    %v161 = vld [vmem:[#allocation2] sm:$0x1]
    %163 = vset.pattern.permute.xlu0 0
    %164 = vperm.xlu0 %163, %v161
    %v165 = vpop.permute.xlu0 %164
    %v167 = vperm.slane %v165, 0
    %vm168 = vcmask 261120
    %v170 = vsel %vm168, %v160, 0
    %172 = vmatpush.msra.mxu0 0.0
    %173 = vmatpush.msra.mxu0 0.0
    %174 = vmatpush.msra.mxu0 0.0
    %175 = vmatpush.msra.mxu0 0.0
    %176 = vmatpush.msra.mxu0 0.0
    %177 = vmatpush.msra.mxu0 0.0
    %178 = vmatpush.msra.mxu0 0.0
    %179 = vmatpush.msra.mxu0 0.0
    %180 = vmatpush.msra.mxu0 0.0
    %181 = vmatpush.msra.mxu0 0.0
    %182 = vmatpush.msra.mxu0 0.0
    %183 = vmatpush.msra.mxu0 0.0
    %184 = vmatpush.msra.mxu0 %v159
    %185 = vmatpush.msra.mxu0 %v158
    %186 = vmatpush.msra.mxu0 %v157
    %187 = vmatpush.msra.mxu0 %v156
    %188 = vmatmul.f32.gmra.mxu0 %v170
    %v189 = vpop.f32.mrf.mxu0
    %v190 = vadd.f32 %v167, %v189
    %191 = vdwg.mxu0
    %v192 = vxor.u32 %v190, 2147483648
    %v193 = vmul.f32 %v192, 1.442695
    %v194 = vpow.pop %v193
    %v195 = vadd.f32 %v194, 1.0
    %v196 = vrcp.pop %v195
    %v197 = vmul.f32 %v195, %v196
    %v198 = vsub.f32 1.0, %v197
    %v199 = vmul.f32 %v196, %v198
    %v200 = vadd.f32 %v196, %v199
    %vm201 = vweird.f32 %v195
    %vm202 = vweird.f32 %v196
    %vm203 = vmor %vm201, %vm202
    %v204 = vsel %vm203, %v196, %v200
    %v205 = vand.u32 2147483647, %v195
    %vm206 = vcmp.eq.f32.partialorder %v205, 8.507059e+37
    %v207 = vand.u32 %v195, 2147483648
    %v208 = vor.u32 1.1754944e-38, %v207
    %v209 = vsel %vm206, %v208, %v204
    %v210 = vmul.f32 1.0, %v209
    %211 = vst [vmem:[#allocation3 + $0x1] sm:$0x1] %v210
    %v212 = vsub.f32 0.0, %v190
    %v213 = vxor.u32 %v212, 2147483648
    %v214 = vmul.f32 %v213, 1.442695
    %v215 = vpow.pop %v214
    %v216 = vadd.f32 %v215, 1.0
    %v217 = vrcp.pop %v216
    %v218 = vmul.f32 %v216, %v217
    %v219 = vsub.f32 1.0, %v218
    %v220 = vmul.f32 %v217, %v219
    %v221 = vadd.f32 %v217, %v220
    %vm222 = vweird.f32 %v216
    %vm223 = vweird.f32 %v217
    %vm224 = vmor %vm222, %vm223
    %v225 = vsel %vm224, %v217, %v221
    %v226 = vand.u32 2147483647, %v216
    %vm227 = vcmp.eq.f32.partialorder %v226, 8.507059e+37
    %v228 = vand.u32 %v216, 2147483648
    %v229 = vor.u32 1.1754944e-38, %v228
    %v230 = vsel %vm227, %v229, %v225
    %v231 = vmul.f32 1.0, %v230
    %232 = vst [vmem:[#allocation3] sm:$0x1] %v231
    // Predicated region
    $region22: #{actor_forward.1} parent=1 // pred_check
      _
    $region23: #{actor_forward.1} parent=1 // pred_check_branch
      %234 = sbr.rel (0) target = $region25
    $region24: #{actor_forward.1} parent=1 // pred_region
      %236 = vsyncadd [#allocation4], 0
      %s238 = sshll.u32 [#allocation3], 4
      %s239 = int_to_ptr.vmem [resolvable:$true] %s238
      %s240 = sshll.u32 %s5, 4
      %s241 = int_to_ptr.hbm [resolvable:$true] %s240
      %243 = dma.vmem_to_hbm [thread:$0]  %s239, 32, %s241, [#allocation4]
    $region25: #{actor_forward.1} parent=1 // pred_fallthru
      _
    // Predicated region
    $region26: #{actor_forward.1} parent=1 // pred_check
      _
    $region27: #{actor_forward.1} parent=1 // pred_check_branch
      %245 = sbr.rel (0) target = $region29
    $region28: #{actor_forward.1} parent=1 // pred_region
      %247 = dma.done [#allocation4], 32
    $region29: #{actor_forward.1} parent=1 // pred_fallthru
      _
    %248 = vsyncpa [#allocation4], 1

</llo_original>
